<compile_context>
chip_gen: v5e
topology: v5e:2x2
jax: 0.10.0
libtpu: 0.0.40
codegen_flags: <defaults>
</compile_context>

<pallas_src>
import math
from functools import partial, lru_cache

import jax
import jax.numpy as jnp
from jax import lax
from jax.experimental import pallas as pl
from jax.experimental.pallas import tpu as pltpu


# ------------------------------------------------------------------ kernel --

def _scat_red_kernel(adj_ref, x_ref, w_ref, b_ref, o_ref, *, order1, order2):
    """One grid step == one propagation chain.

    grid axis 0 ("parallel", 2 steps):
      step 0: A_tilde chain -> supports 0..2 -> output columns [0, wpad)
      step 1: P chain       -> supports 3..4 -> output columns [wpad, 2*wpad)
    """
    chain = pl.program_id(0)
    A = adj_ref[0]                        # (N, N)  bf16 (fast path) or f32
    X = x_ref[...]                        # (N, F)  f32
    cdt = A.dtype                         # MXU operand dtype
    f = X.shape[1]

    @pl.when(chain == 0)
    def _():
        # supports 0..2:  (A~ X) W0, (A~^2 X) W1, (A~^3 X) W2   (+ biases)
        p1 = jnp.dot(A, X.astype(cdt), preferred_element_type=jnp.float32)
        p2 = jnp.dot(A, p1.astype(cdt), preferred_element_type=jnp.float32)
        p3 = jnp.dot(A, p2.astype(cdt), preferred_element_type=jnp.float32)
        z = jnp.concatenate([p1, p2, p3], axis=1)              # (N, 3F) f32
        o_ref[...] = (jnp.dot(z, w_ref[0],
                              preferred_element_type=jnp.float32) + b_ref[0])

    @pl.when(chain == 1)
    def _():
        # P = 0.5 * (adj @ diag(1/colsum(adj)) + I)   (normalizem_tentor_mx)
        n = A.shape[0]
        # Column sums directly as an (N,1) column via one cheap MXU pass
        # (contract adj's dim 0 against a ones vector): no adj_norm temp, no
        # f32 (N,N) cast, no (1,N)->(N,1) relayout.
        ones_col = jnp.ones((n, 1), dtype=cdt)
        colsum = lax.dot_general(A, ones_col, (((0,), (0,)), ((), ())),
                                 preferred_element_type=jnp.float32)   # (N, 1)
        # Exact reciprocal (O(N), off the hot path).  No zero-column guard on
        # purpose: mirrors degrees.pow(-1) in the PyTorch reference.
        deg_inv = 1.0 / colsum

        # P^k X without materializing adj_norm or the identity:
        #   P v = 0.5 * (adj @ (deg_inv * v) + v)
        max_order = 2 * max(order1, order2)
        q = {0: X}
        cur = X
        for _k in range(1, max_order + 1):
            scaled = (deg_inv * cur).astype(cdt)               # row-scale (N,F)
            cur = 0.5 * (jnp.dot(A, scaled,
                                 preferred_element_type=jnp.float32) + cur)
            q[_k] = cur

        d1 = q[order1] - q[2 * order1]                         # (P^o1 - P^{2o1}) X
        d2 = q[order2] - q[2 * order2]                         # (P^o2 - P^{2o2}) X
        z = jnp.concatenate([d1, d2], axis=1)                  # (N, 2F) f32
        w = w_ref[0]                                           # (3F, wpad)
        o_ref[...] = (jnp.dot(z, w[:2 * f, :],
                              preferred_element_type=jnp.float32) + b_ref[0])


# --------------------------------------------------------------- wrappers ---

@lru_cache(maxsize=None)
def _vmem_limit_bytes():
    """Raise the scoped-VMEM cap (defaults: 16 MiB v5e / 32 MiB v6e,v7x) toward
    the chip's physical VMEM, leaving headroom."""
    try:
        cap = pltpu.get_tpu_info().vmem_capacity_bytes
        return int(max(32 << 20, min(cap - (16 << 20), 112 << 20)))
    except Exception:
        return 48 << 20        # safe on every generation (v7x has 64 MiB)


def pack_projection_params(weights, biases):
    """Pack the 5 per-support projections into TWO block-diagonal slabs (one per
    propagation chain), zero-padded to a lane-dense multiple-of-128 width.
    Parameter-static: call once, not per forward."""
    f = weights[0].shape[0]
    m_a = sum(int(w.shape[1]) for w in weights[:3])    # supports 0..2
    m_b = sum(int(w.shape[1]) for w in weights[3:])    # supports 3..4
    wpad = max(128, ((max(m_a, m_b) + 127) // 128) * 128)
    w_packed = jnp.zeros((2, 3 * f, wpad), jnp.float32)
    b_packed = jnp.zeros((2, 1, wpad), jnp.float32)
    col = 0
    for i, (w, b) in enumerate(zip(weights[:3], biases[:3])):
        m = int(w.shape[1])
        w_packed = w_packed.at[0, i * f:(i + 1) * f, col:col + m].set(w)
        b_packed = b_packed.at[0, 0, col:col + m].set(b)
        col += m
    col = 0
    for i, (w, b) in enumerate(zip(weights[3:], biases[3:])):
        m = int(w.shape[1])
        w_packed = w_packed.at[1, i * f:(i + 1) * f, col:col + m].set(w)
        b_packed = b_packed.at[1, 0, col:col + m].set(b)
        col += m
    return w_packed, b_packed, (m_a, m_b, wpad)


def prepare_adjacencies(A_tilde, adj, dtype=jnp.bfloat16):
    """Stack the two graph operands as (2, N, N) in the MXU dtype.
    Graph-static: do this once per graph (bf16 halves the kernel's HBM read)."""
    return jnp.stack([A_tilde, adj], axis=0).astype(dtype)


def scat_red_forward_prepared(features, adj_stack, w_packed, b_packed, meta,
                              order1=1, order2=2):
    n, f = features.shape
    m_a, m_b, wpad = meta
    kernel = partial(_scat_red_kernel, order1=order1, order2=order2)
    out = pl.pallas_call(
        kernel,
        grid=(2,),                                          # one step per chain
        in_specs=[
            pl.BlockSpec((1, n, n), lambda i: (i, 0, 0)),        # this chain's adjacency
            pl.BlockSpec((n, f), lambda i: (0, 0)),              # features (shared)
            pl.BlockSpec((1, 3 * f, wpad), lambda i: (i, 0, 0)),  # packed weights
            pl.BlockSpec((1, 1, wpad), lambda i: (i, 0, 0)),      # packed biases
        ],
        out_specs=pl.BlockSpec((n, wpad), lambda i: (0, i)),     # lane-dense slab
        out_shape=jax.ShapeDtypeStruct((n, 2 * wpad), jnp.float32),
        compiler_params=pltpu.CompilerParams(
            dimension_semantics=("parallel",),
            vmem_limit_bytes=_vmem_limit_bytes()),
    )(adj_stack, features, w_packed, b_packed)
    # Strip lane padding; identical to the PyTorch torch.cat of the 5 supports.
    return jnp.concatenate([out[:, :m_a], out[:, wpad:wpad + m_b]], axis=1)


def scat_red_forward(features, A_tilde, adj, weights, biases,
                     order1=1, order2=2, compute_dtype=jnp.bfloat16):
    """Convenience end-to-end forward (prep + fused kernel).  For repeated calls
    on the same graph / parameters, run the two prep steps once and call
    scat_red_forward_prepared directly."""
    adj_stack = prepare_adjacencies(A_tilde, adj, compute_dtype)
    packed = pack_projection_params(weights, biases)
    return scat_red_forward_prepared(features, adj_stack, *packed,
                                     order1=order1, order2=order2)


# ----------------------------------------------------------------- params ---

def init_scat_red_params(key, in_features, med_f0, med_f1, med_f2, med_f3, med_f4):
    """Deterministic init mirroring SCAT_Red.reset_parameters."""
    meds = [med_f0, med_f1, med_f2, med_f3, med_f4]
    keys = jax.random.split(key, 10)
    weights, biases = [], []
    for i, m in enumerate(meds):
        bound = math.sqrt(6.0 / (in_features + m))            # xavier_uniform_
        weights.append(jax.random.uniform(keys[i], (in_features, m),
                                          jnp.float32, -bound, bound))
        stdv = 1.0 / math.sqrt(m)
        biases.append(jax.random.uniform(keys[5 + i], (m,),
                                         jnp.float32, -stdv, stdv))
    return weights, biases


# -------------------------------------------------------------- reference ---

def scat_red_reference(features, A_tilde, adj, weights, biases,
                       order1=1, order2=2):
    """Pure-JAX reference of the PyTorch forward (for correctness checking)."""
    W0, W1, W2, W3, W4 = weights
    b0, b1, b2, b3, b4 = biases
    p1 = A_tilde @ features
    p2 = A_tilde @ p1
    p3 = A_tilde @ p2
    s0 = p1 @ W0 + b0
    s1 = p2 @ W1 + b1
    s2 = p3 @ W2 + b2
    deg_inv = 1.0 / jnp.sum(adj, axis=0)
    adj_norm = adj * deg_inv[None, :]
    P = 0.5 * (adj_norm + jnp.eye(adj.shape[0], dtype=adj.dtype))
    def pk(x, k):
        for _ in range(k):
            x = P @ x
        return x
    s3 = (pk(features, order1) - pk(features, 2 * order1)) @ W3 + b3
    s4 = (pk(features, order2) - pk(features, 2 * order2)) @ W4 + b4
    return jnp.concatenate([s0, s1, s2, s3, s4], axis=1)


# ------------------------------------------------------------------- main ---

if __name__ == "__main__":
    N = 16               # number of graph nodes
    in_features = 32
    med = (8, 8, 8, 8, 8)   # med_f0 .. med_f4

    key = jax.random.PRNGKey(0)
    k_feat, k_at, k_adj, k_param = jax.random.split(key, 4)

    features = jax.random.normal(k_feat, (N, in_features), jnp.float32)

    # A_tilde: symmetric-normalized-style dense adjacency surrogate
    a = jax.random.uniform(k_at, (N, N), jnp.float32, 0.0, 1.0)
    A_tilde = (a + a.T) * 0.5
    A_tilde = A_tilde / jnp.sum(A_tilde, axis=1, keepdims=True)

    # adj: strictly positive so colsum^-1 is finite (connected-graph analogue)
    adj = jax.random.uniform(k_adj, (N, N), jnp.float32, 0.1, 1.0)

    weights, biases = init_scat_red_params(k_param, in_features, *med)
    ref = scat_red_reference(features, A_tilde, adj, weights, biases)

    # --- exact-dtype (f32) path: validates kernel structure / packing --------
    packed = pack_projection_params(weights, biases)
    stack_f32 = prepare_adjacencies(A_tilde, adj, jnp.float32)
    out_f32 = jax.block_until_ready(
        scat_red_forward_prepared(features, stack_f32, *packed))
    assert out_f32.shape == (N, sum(med)), out_f32.shape
    assert jnp.all(jnp.isfinite(out_f32))
    assert jnp.allclose(out_f32, ref, rtol=1e-2, atol=1e-2), \
        float(jnp.max(jnp.abs(out_f32 - ref)))

    # --- bf16 fast path: halved adjacency HBM traffic, native-MXU dtype ------
    out_bf16 = jax.block_until_ready(
        scat_red_forward(features, A_tilde, adj, weights, biases))
    assert out_bf16.shape == (N, sum(med)), out_bf16.shape
    assert jnp.all(jnp.isfinite(out_bf16))
    # bf16 rounding compounds through the A~^3 / P^4 chains -> looser tolerance
    assert jnp.allclose(out_bf16, ref, rtol=5e-2, atol=5e-2), \
        float(jnp.max(jnp.abs(out_bf16 - ref)))

    print("KERNEL_OK")
</pallas_src>

<mosaic_0001>
module attributes {stable_mosaic.version = 11 : i64} {
  func.func @_scat_red_kernel(%arg0: i32, %arg1: memref<1x16x16xf32, #tpu.memory_space<vmem>>, %arg2: memref<16x32xf32, #tpu.memory_space<vmem>>, %arg3: memref<1x96x128xf32, #tpu.memory_space<vmem>>, %arg4: memref<1x1x128xf32, #tpu.memory_space<vmem>>, %arg5: memref<16x128xf32, #tpu.memory_space<vmem>>) attributes {dimension_semantics = [#tpu.dimension_semantics<parallel>], iteration_bounds = array<i64: 2>, scalar_prefetch = 0 : i64, scratch_operands = 0 : i64, tpu.core_type = #tpu.core_type<tc>, window_params = [{transform_indices = @transform_0, window_bounds = array<i64: 1, 16, 16>}, {pipeline_mode = #tpu.pipeline_mode<synchronous>, transform_indices = @transform_1, window_bounds = array<i64: 16, 32>}, {transform_indices = @transform_2, window_bounds = array<i64: 1, 96, 128>}, {transform_indices = @transform_3, window_bounds = array<i64: 1, 1, 128>}, {transform_indices = @transform_4, window_bounds = array<i64: 16, 128>}]} {
    %c0 = arith.constant 0 : index
    %c0_0 = arith.constant 0 : index
    %c0_1 = arith.constant 0 : index
    %0 = vector.load %arg1[%c0, %c0_0, %c0_1] : memref<1x16x16xf32, #tpu.memory_space<vmem>>, vector<1x16x16xf32>
    %1 = vector.shape_cast %0 : vector<1x16x16xf32> to vector<16x16xf32>
    %c0_2 = arith.constant 0 : index
    %c0_3 = arith.constant 0 : index
    %2 = vector.load %arg2[%c0_2, %c0_3] : memref<16x32xf32, #tpu.memory_space<vmem>>, vector<16x32xf32>
    %c0_i32 = arith.constant 0 : i32
    %3 = arith.cmpi eq, %arg0, %c0_i32 : i32
    %4 = arith.extui %3 : i1 to i32
    %c0_i32_4 = arith.constant 0 : i32
    %5 = arith.cmpi ne, %4, %c0_i32_4 : i32
    scf.if %5 {
      %cst = arith.constant dense<0.000000e+00> : vector<16x32xf32>
      %9 = tpu.matmul %1, %2, %cst {dimension_numbers = #tpu.dot_dimension_numbers<[1], [0], [0], [1], [0, 0, 1, 1], [], []>} : vector<16x16xf32>, vector<16x32xf32>, vector<16x32xf32> -> vector<16x32xf32>
      %cst_6 = arith.constant dense<0.000000e+00> : vector<16x32xf32>
      %10 = tpu.matmul %1, %9, %cst_6 {dimension_numbers = #tpu.dot_dimension_numbers<[1], [0], [0], [1], [0, 0, 1, 1], [], []>} : vector<16x16xf32>, vector<16x32xf32>, vector<16x32xf32> -> vector<16x32xf32>
      %cst_7 = arith.constant dense<0.000000e+00> : vector<16x32xf32>
      %11 = tpu.matmul %1, %10, %cst_7 {dimension_numbers = #tpu.dot_dimension_numbers<[1], [0], [0], [1], [0, 0, 1, 1], [], []>} : vector<16x16xf32>, vector<16x32xf32>, vector<16x32xf32> -> vector<16x32xf32>
      %12 = tpu.concatenate %9, %10, %11 in 1 : vector<16x32xf32>, vector<16x32xf32>, vector<16x32xf32> -> vector<16x96xf32>
      %c0_8 = arith.constant 0 : index
      %c0_9 = arith.constant 0 : index
      %c0_10 = arith.constant 0 : index
      %13 = vector.load %arg3[%c0_8, %c0_9, %c0_10] : memref<1x96x128xf32, #tpu.memory_space<vmem>>, vector<1x96x128xf32>
      %14 = vector.shape_cast %13 : vector<1x96x128xf32> to vector<96x128xf32>
      %cst_11 = arith.constant dense<0.000000e+00> : vector<16x128xf32>
      %15 = tpu.matmul %12, %14, %cst_11 {dimension_numbers = #tpu.dot_dimension_numbers<[1], [0], [0], [1], [0, 0, 1, 1], [], []>} : vector<16x96xf32>, vector<96x128xf32>, vector<16x128xf32> -> vector<16x128xf32>
      %c0_12 = arith.constant 0 : index
      %c0_13 = arith.constant 0 : index
      %c0_14 = arith.constant 0 : index
      %16 = vector.load %arg4[%c0_12, %c0_13, %c0_14] : memref<1x1x128xf32, #tpu.memory_space<vmem>>, vector<1x1x128xf32>
      %17 = vector.shape_cast %16 : vector<1x1x128xf32> to vector<1x128xf32>
      %18 = vector.broadcast %17 : vector<1x128xf32> to vector<16x128xf32>
      %19 = arith.addf %15, %18 : vector<16x128xf32>
      %c0_15 = arith.constant 0 : index
      %c0_16 = arith.constant 0 : index
      %20 = vector.load %arg5[%c0_15, %c0_16] : memref<16x128xf32, #tpu.memory_space<vmem>>, vector<16x128xf32>
      tpu.vector_store %arg5[%c0_15, %c0_16], %19 {strides = array<i32>} : memref<16x128xf32, #tpu.memory_space<vmem>>, vector<16x128xf32>,
    } else {
    }
    %c1_i32 = arith.constant 1 : i32
    %6 = arith.cmpi eq, %arg0, %c1_i32 : i32
    %7 = arith.extui %6 : i1 to i32
    %c0_i32_5 = arith.constant 0 : i32
    %8 = arith.cmpi ne, %7, %c0_i32_5 : i32
    scf.if %8 {
      %cst = arith.constant 1.000000e+00 : f32
      %9 = vector.broadcast %cst : f32 to vector<16x1xf32>
      %cst_6 = arith.constant dense<0.000000e+00> : vector<16x1xf32>
      %10 = tpu.matmul %1, %9, %cst_6 {dimension_numbers = #tpu.dot_dimension_numbers<[0], [0], [1], [1], [0, 1, 1, 1], [], []>} : vector<16x16xf32>, vector<16x1xf32>, vector<16x1xf32> -> vector<16x1xf32>
      %cst_7 = arith.constant 1.000000e+00 : f32
      %11 = vector.broadcast %cst_7 : f32 to vector<16x1xf32>
      %12 = arith.divf %11, %10 : vector<16x1xf32>
      %13 = vector.broadcast %12 : vector<16x1xf32> to vector<16x32xf32>
      %14 = arith.mulf %13, %2 : vector<16x32xf32>
      %cst_8 = arith.constant dense<0.000000e+00> : vector<16x32xf32>
      %15 = tpu.matmul %1, %14, %cst_8 {dimension_numbers = #tpu.dot_dimension_numbers<[1], [0], [0], [1], [0, 0, 1, 1], [], []>} : vector<16x16xf32>, vector<16x32xf32>, vector<16x32xf32> -> vector<16x32xf32>
      %16 = arith.addf %15, %2 : vector<16x32xf32>
      %cst_9 = arith.constant 5.000000e-01 : f32
      %17 = vector.broadcast %cst_9 : f32 to vector<16x32xf32>
      %18 = arith.mulf %17, %16 : vector<16x32xf32>
      %19 = vector.broadcast %12 : vector<16x1xf32> to vector<16x32xf32>
      %20 = arith.mulf %19, %18 : vector<16x32xf32>
      %cst_10 = arith.constant dense<0.000000e+00> : vector<16x32xf32>
      %21 = tpu.matmul %1, %20, %cst_10 {dimension_numbers = #tpu.dot_dimension_numbers<[1], [0], [0], [1], [0, 0, 1, 1], [], []>} : vector<16x16xf32>, vector<16x32xf32>, vector<16x32xf32> -> vector<16x32xf32>
      %22 = arith.addf %21, %18 : vector<16x32xf32>
      %cst_11 = arith.constant 5.000000e-01 : f32
      %23 = vector.broadcast %cst_11 : f32 to vector<16x32xf32>
      %24 = arith.mulf %23, %22 : vector<16x32xf32>
      %25 = vector.broadcast %12 : vector<16x1xf32> to vector<16x32xf32>
      %26 = arith.mulf %25, %24 : vector<16x32xf32>
      %cst_12 = arith.constant dense<0.000000e+00> : vector<16x32xf32>
      %27 = tpu.matmul %1, %26, %cst_12 {dimension_numbers = #tpu.dot_dimension_numbers<[1], [0], [0], [1], [0, 0, 1, 1], [], []>} : vector<16x16xf32>, vector<16x32xf32>, vector<16x32xf32> -> vector<16x32xf32>
      %28 = arith.addf %27, %24 : vector<16x32xf32>
      %cst_13 = arith.constant 5.000000e-01 : f32
      %29 = vector.broadcast %cst_13 : f32 to vector<16x32xf32>
      %30 = arith.mulf %29, %28 : vector<16x32xf32>
      %31 = vector.broadcast %12 : vector<16x1xf32> to vector<16x32xf32>
      %32 = arith.mulf %31, %30 : vector<16x32xf32>
      %cst_14 = arith.constant dense<0.000000e+00> : vector<16x32xf32>
      %33 = tpu.matmul %1, %32, %cst_14 {dimension_numbers = #tpu.dot_dimension_numbers<[1], [0], [0], [1], [0, 0, 1, 1], [], []>} : vector<16x16xf32>, vector<16x32xf32>, vector<16x32xf32> -> vector<16x32xf32>
      %34 = arith.addf %33, %30 : vector<16x32xf32>
      %cst_15 = arith.constant 5.000000e-01 : f32
      %35 = vector.broadcast %cst_15 : f32 to vector<16x32xf32>
      %36 = arith.mulf %35, %34 : vector<16x32xf32>
      %37 = arith.subf %18, %24 : vector<16x32xf32>
      %38 = arith.subf %24, %36 : vector<16x32xf32>
      %39 = tpu.concatenate %37, %38 in 1 : vector<16x32xf32>, vector<16x32xf32> -> vector<16x64xf32>
      %c0_16 = arith.constant 0 : index
      %c0_17 = arith.constant 0 : index
      %c0_18 = arith.constant 0 : index
      %40 = vector.load %arg3[%c0_16, %c0_17, %c0_18] : memref<1x96x128xf32, #tpu.memory_space<vmem>>, vector<1x96x128xf32>
      %41 = vector.shape_cast %40 : vector<1x96x128xf32> to vector<96x128xf32>
      %42 = vector.extract_strided_slice %41 {offsets = [0, 0], sizes = [64, 128], strides = [1, 1]} : vector<96x128xf32> to vector<64x128xf32>
      %cst_19 = arith.constant dense<0.000000e+00> : vector<16x128xf32>
      %43 = tpu.matmul %39, %42, %cst_19 {dimension_numbers = #tpu.dot_dimension_numbers<[1], [0], [0], [1], [0, 0, 1, 1], [], []>} : vector<16x64xf32>, vector<64x128xf32>, vector<16x128xf32> -> vector<16x128xf32>
      %c0_20 = arith.constant 0 : index
      %c0_21 = arith.constant 0 : index
      %c0_22 = arith.constant 0 : index
      %44 = vector.load %arg4[%c0_20, %c0_21, %c0_22] : memref<1x1x128xf32, #tpu.memory_space<vmem>>, vector<1x1x128xf32>
      %45 = vector.shape_cast %44 : vector<1x1x128xf32> to vector<1x128xf32>
      %46 = vector.broadcast %45 : vector<1x128xf32> to vector<16x128xf32>
      %47 = arith.addf %43, %46 : vector<16x128xf32>
      %c0_23 = arith.constant 0 : index
      %c0_24 = arith.constant 0 : index
      %48 = vector.load %arg5[%c0_23, %c0_24] : memref<16x128xf32, #tpu.memory_space<vmem>>, vector<16x128xf32>
      tpu.vector_store %arg5[%c0_23, %c0_24], %47 {strides = array<i32>} : memref<16x128xf32, #tpu.memory_space<vmem>>, vector<16x128xf32>,
    } else {
    }
    return
  }
  func.func @transform_0(%arg0: i32) -> (i32, i32, i32) {
    %c0_i32 = arith.constant 0 : i32
    %c0_i32_0 = arith.constant 0 : i32
    %c0_i32_1 = arith.constant 0 : i32
    return %arg0, %c0_i32, %c0_i32_0 : i32, i32, i32
  }
  func.func @transform_1(%arg0: i32) -> (i32, i32) {
    %c0_i32 = arith.constant 0 : i32
    %c0_i32_0 = arith.constant 0 : i32
    %c0_i32_1 = arith.constant 0 : i32
    return %c0_i32, %c0_i32_0 : i32, i32
  }
  func.func @transform_2(%arg0: i32) -> (i32, i32, i32) {
    %c0_i32 = arith.constant 0 : i32
    %c0_i32_0 = arith.constant 0 : i32
    %c0_i32_1 = arith.constant 0 : i32
    return %arg0, %c0_i32, %c0_i32_0 : i32, i32, i32
  }
  func.func @transform_3(%arg0: i32) -> (i32, i32, i32) {
    %c0_i32 = arith.constant 0 : i32
    %c0_i32_0 = arith.constant 0 : i32
    %c0_i32_1 = arith.constant 0 : i32
    return %arg0, %c0_i32, %c0_i32_0 : i32, i32, i32
  }
  func.func @transform_4(%arg0: i32) -> (i32, i32) {
    %c0_i32 = arith.constant 0 : i32
    %c0_i32_0 = arith.constant 0 : i32
    return %c0_i32, %arg0 : i32, i32
  }
}

</mosaic_0001>

<llo_original>
// kernel: tpu_custom_call.1
$region0: #{tpu_custom_call.1}
  #allocation0 [shape = 'u32[]', space=smem, size = 0x4, offset = 0x4, fixed_abs, tag = 'smem constant byte address 0x4 - core index']
  #allocation1 [shape = 'u32[72,128]{1,0:T(1,128)}', space=vmem, size = 0x9000, scoped, tag = 'internal scratch']
  %s0 = inlined_call_operand.hbm [shape: f32[2,16,16], index: 0, kind: input, shape index: {}]
  %s1 = inlined_call_operand.hbm [shape: f32[16,32], index: 1, kind: input, shape index: {}]
  %s2 = inlined_call_operand.hbm [shape: f32[2,96,128], index: 2, kind: input, shape index: {}]
  %s3 = inlined_call_operand.vmem [shape: f32[2,1,128], index: 3, kind: input, shape index: {}]
  %s4 = inlined_call_operand.hbm [shape: f32[16,256], index: 4, kind: output, shape index: {}]
  %s5 = sld [smem:[#allocation0]]
  $region69: #{tpu_custom_call.1} parent=0
    _
  %s7 = ssub.s32 1, %s5
  %s8 = scalar_select 0, %s7, %s5
  $region1: #{tpu_custom_call.1} parent=0
    #allocation2 [shape = 'u8[16384]{0}', space=vmem, size = 0x4000, scoped, tag = 'input window, operand 0']
    #allocation3 [shape = 's32[2]{0}', space=sflag, size = 0x8, scoped, tag = 'scoped memory for tpu_custom_call.1']
    #allocation4 [shape = 's32[2]{0}', space=sflag, size = 0x8, scoped, tag = 'scoped memory for tpu_custom_call.1']
    #allocation5 [shape = 'u8[8192]{0}', space=vmem, size = 0x2000, scoped, tag = 'input window, operand 1, single buffered']
    #allocation6 [shape = 's32[1]{0}', space=sflag, size = 0x4, scoped, tag = 'scoped memory for tpu_custom_call.1']
    #allocation7 [shape = 'u8[98304]{0}', space=vmem, size = 0x18000, scoped, tag = 'input window, operand 2']
    #allocation8 [shape = 'u8[16384]{0}', space=vmem, size = 0x4000, scoped, tag = 'output window, operand 0']
    %9 = vsyncpa [#allocation3], 0
    %s10 = scalar_lea.sflag [#allocation3], 1
    %11 = vsyncpa %s10, 0
    %12 = vsyncpa [#allocation6], 0
    %13 = vsyncpa [#allocation4], 0
    %s14 = scalar_lea.sflag [#allocation4], 1
    %15 = vsyncpa %s14, 0
    loop: start=0, step=1, limit=4
    $region2: #{tpu_custom_call.1} parent=1 // loop_pre_header
      _
    $region3: #{tpu_custom_call.1} parent=1 // loop_header
      %s17 = sphi 0, %s21
      %p18 = scmp.ge.s32.totalorder %s17, 4
      %s27 = sphi 0, %s29
      %s30 = sphi 0, %s27
      %s31 = sphi 0, %s30
      %s47 = sphi 0, %s31
      %s51 = sphi 0, %s51
      %s53 = sphi 0, %s51
      %s54 = sphi 0, %s53
      %s68 = sphi 0, %s54
      %s74 = sphi 0, %s76
      %s77 = sphi 0, %s74
      %s78 = sphi 0, %s77
      %s94 = sphi 0, %s78
      %s100 = sphi 0, %s102
      %s103 = sphi 0, %s100
      %s104 = sphi 0, %s103
      %s120 = sphi 0, %s104
      %s126 = sphi 0, %s128
      %s129 = sphi 0, %s126
      %s130 = sphi 0, %s129
      %s146 = sphi 0, %s130
    $region4: #{tpu_custom_call.1} parent=1 // loop_header_branch
      %20 = sbr.rel (%p18) target = $region8
    $region5: #{tpu_custom_call.1} parent=1 // loop_body
      %s22 = ssub.s32 %s17, 1
      %s23 = ssub.s32 %s17, 2
      %s24 = sadd.s32 %s17, 1
      %s25 = ssub.s32 %s17, %s24
      %p26 = scmp.eq.s32.totalorder %s25, 0
      %s28 = sadd.s32 %s27, 1
      %s29 = scalar_select %p26, %s27, %s28
      %p32 = pneg %p26
      %p33 = scmp.eq.s32.totalorder %s17, 1
      %p34 = por %p32, %p33
      %p35 = scmp.ne.s32.totalorder %s27, %s30
      %p36 = scmp.eq.s32.totalorder %s17, 0
      %p37 = por %p35, %p36
      %p38 = scmp.ne.s32.totalorder %s27, %s30
      %p39 = scmp.eq.s32.totalorder %s22, 1
      %p40 = por %p38, %p39
      %p41 = scmp.ne.s32.totalorder %s30, %s31
      %p42 = scmp.eq.s32.totalorder %s22, 0
      %p43 = por %p41, %p42
      %p44 = scmp.ne.s32.totalorder %s30, %s31
      %p45 = scmp.eq.s32.totalorder %s23, 1
      %p46 = por %p44, %p45
      %p48 = scmp.ne.s32.totalorder %s31, %s47
      %p49 = scmp.eq.s32.totalorder %s23, 0
      %p50 = por %p48, %p49
      %s52 = sadd.s32 %s51, 1
      %p55 = scmp.eq.s32.totalorder %s17, 1
      %p56 = scmp.ne.s32.totalorder %s51, %s53
      %p57 = scmp.eq.s32.totalorder %s17, 0
      %p58 = por %p56, %p57
      %p59 = scmp.ne.s32.totalorder %s51, %s53
      %p60 = scmp.eq.s32.totalorder %s22, 1
      %p61 = por %p59, %p60
      %p62 = scmp.ne.s32.totalorder %s53, %s54
      %p63 = scmp.eq.s32.totalorder %s22, 0
      %p64 = por %p62, %p63
      %p65 = scmp.ne.s32.totalorder %s53, %s54
      %p66 = scmp.eq.s32.totalorder %s23, 1
      %p67 = por %p65, %p66
      %p69 = scmp.ne.s32.totalorder %s54, %s68
      %p70 = scmp.eq.s32.totalorder %s23, 0
      %p71 = por %p69, %p70
      %s72 = ssub.s32 %s17, %s24
      %p73 = scmp.eq.s32.totalorder %s72, 0
      %s75 = sadd.s32 %s74, 1
      %s76 = scalar_select %p73, %s74, %s75
      %p79 = pneg %p73
      %p80 = scmp.eq.s32.totalorder %s17, 1
      %p81 = por %p79, %p80
      %p82 = scmp.ne.s32.totalorder %s74, %s77
      %p83 = scmp.eq.s32.totalorder %s17, 0
      %p84 = por %p82, %p83
      %p85 = scmp.ne.s32.totalorder %s74, %s77
      %p86 = scmp.eq.s32.totalorder %s22, 1
      %p87 = por %p85, %p86
      %p88 = scmp.ne.s32.totalorder %s77, %s78
      %p89 = scmp.eq.s32.totalorder %s22, 0
      %p90 = por %p88, %p89
      %p91 = scmp.ne.s32.totalorder %s77, %s78
      %p92 = scmp.eq.s32.totalorder %s23, 1
      %p93 = por %p91, %p92
      %p95 = scmp.ne.s32.totalorder %s78, %s94
      %p96 = scmp.eq.s32.totalorder %s23, 0
      %p97 = por %p95, %p96
      %s98 = ssub.s32 %s17, %s24
      %p99 = scmp.eq.s32.totalorder %s98, 0
      %s101 = sadd.s32 %s100, 1
      %s102 = scalar_select %p99, %s100, %s101
      %p105 = pneg %p99
      %p106 = scmp.eq.s32.totalorder %s17, 1
      %p107 = por %p105, %p106
      %p108 = scmp.ne.s32.totalorder %s100, %s103
      %p109 = scmp.eq.s32.totalorder %s17, 0
      %p110 = por %p108, %p109
      %p111 = scmp.ne.s32.totalorder %s100, %s103
      %p112 = scmp.eq.s32.totalorder %s22, 1
      %p113 = por %p111, %p112
      %p114 = scmp.ne.s32.totalorder %s103, %s104
      %p115 = scmp.eq.s32.totalorder %s22, 0
      %p116 = por %p114, %p115
      %p117 = scmp.ne.s32.totalorder %s103, %s104
      %p118 = scmp.eq.s32.totalorder %s23, 1
      %p119 = por %p117, %p118
      %p121 = scmp.ne.s32.totalorder %s104, %s120
      %p122 = scmp.eq.s32.totalorder %s23, 0
      %p123 = por %p121, %p122
      %s124 = ssub.s32 %s17, %s24
      %p125 = scmp.eq.s32.totalorder %s124, 0
      %s127 = sadd.s32 %s126, 1
      %s128 = scalar_select %p125, %s126, %s127
      %p131 = pneg %p125
      %p132 = scmp.eq.s32.totalorder %s17, 1
      %p133 = por %p131, %p132
      %p134 = scmp.ne.s32.totalorder %s126, %s129
      %p135 = scmp.eq.s32.totalorder %s17, 0
      %p136 = por %p134, %p135
      %p137 = scmp.ne.s32.totalorder %s126, %s129
      %p138 = scmp.eq.s32.totalorder %s22, 1
      %p139 = por %p137, %p138
      %p140 = scmp.ne.s32.totalorder %s129, %s130
      %p141 = scmp.eq.s32.totalorder %s22, 0
      %p142 = por %p140, %p141
      %p143 = scmp.ne.s32.totalorder %s129, %s130
      %p144 = scmp.eq.s32.totalorder %s23, 1
      %p145 = por %p143, %p144
      %p147 = scmp.ne.s32.totalorder %s130, %s146
      %p148 = scmp.eq.s32.totalorder %s23, 0
      %p149 = por %p147, %p148
      %p150 = scmp.le.s32.totalorder 1, %s17
      %p151 = scmp.lt.s32.totalorder %s17, 3
      %p152 = pnand %p150, %p151
      %p153 = pneg %p152
      // Predicated region
      $region9: #{tpu_custom_call.1} parent=5 // pred_check
        _
      $region10: #{tpu_custom_call.1} parent=5 // pred_check_branch
        %155 = sbr.rel (%p152) target = $region12
      $region11: #{tpu_custom_call.1} parent=5 // pred_region
        %s156 = ssub.s32 %s17, 1
        // Predicated region
        $region13: #{tpu_custom_call.1} parent=11 // pred_check
          %p157 = pneg %p64
        $region14: #{tpu_custom_call.1} parent=11 // pred_check_branch
          %159 = sbr.rel (%p157) target = $region16
        $region15: #{tpu_custom_call.1} parent=11 // pred_region
          %161 = vsyncadd [#allocation6], 0
          %s162 = sshll.u32 %s1, 4
          %s163 = int_to_ptr.hbm [resolvable:$true] %s162
          %s164 = sshll.u32 [#allocation5], 4
          %s165 = int_to_ptr.vmem [resolvable:$true] %s164
          %170 = dma.hbm_to_vmem [thread:$0]  %s163, 256, %s165, [#allocation6], 128, 128, 8
        $region16: #{tpu_custom_call.1} parent=11 // pred_fallthru
          _
      $region12: #{tpu_custom_call.1} parent=5 // pred_fallthru
        _
      %p171 = scmp.lt.s32.totalorder %s17, 2
      // Predicated region
      $region17: #{tpu_custom_call.1} parent=5 // pred_check
        %p172 = pneg %p171
      $region18: #{tpu_custom_call.1} parent=5 // pred_check_branch
        %174 = sbr.rel (%p172) target = $region20
      $region19: #{tpu_custom_call.1} parent=5 // pred_region
        // Predicated region
        $region21: #{tpu_custom_call.1} parent=19 // pred_check
          %p175 = pneg %p37
        $region22: #{tpu_custom_call.1} parent=19 // pred_check_branch
          %177 = sbr.rel (%p175) target = $region24
        $region23: #{tpu_custom_call.1} parent=19 // pred_region
          %s178 = sand.u32 %s17, 1
          %s179 = scalar_lea.sflag [#allocation3], %s178
          %s180 = sand.u32 %s27, 1
          %s181 = smul.addr %s180, 16
          %s182 = scalar_lea.vmem [#allocation2], %s181
          %184 = vsyncadd %s179, 0
          %s185 = smul.addr %s17, 2
          %s186 = smul.addr %s185, 8
          %s187 = scalar_lea.hbm %s0, %s186
          %s188 = sshll.u32 %s187, 4
          %s189 = int_to_ptr.hbm [resolvable:$true] %s188
          %s190 = sshll.u32 %s182, 4
          %s191 = int_to_ptr.vmem [resolvable:$true] %s190
          %196 = dma.hbm_to_vmem [thread:$0]  %s189, 256, %s191, %s179, 128, 128, 8
        $region24: #{tpu_custom_call.1} parent=19 // pred_fallthru
          _
        // Predicated region
        $region25: #{tpu_custom_call.1} parent=19 // pred_check
          %p197 = pneg %p84
        $region26: #{tpu_custom_call.1} parent=19 // pred_check_branch
          %199 = sbr.rel (%p197) target = $region28
        $region27: #{tpu_custom_call.1} parent=19 // pred_region
          %s200 = sand.u32 %s17, 1
          %s201 = scalar_lea.sflag [#allocation3], %s200
          %s202 = sand.u32 %s74, 1
          %s203 = smul.addr %s202, 96
          %s204 = scalar_lea.vmem [#allocation7], %s203
          %206 = vsyncadd %s201, 0
          %s207 = smul.addr %s17, 12
          %s208 = smul.addr %s207, 8
          %s209 = scalar_lea.hbm %s2, %s208
          %s210 = sshll.u32 %s209, 4
          %s211 = int_to_ptr.hbm [resolvable:$true] %s210
          %s212 = sshll.u32 %s204, 4
          %s213 = int_to_ptr.vmem [resolvable:$true] %s212
          %218 = dma.hbm_to_vmem [thread:$0]  %s211, 1536, %s213, %s201, 128, 128, 8
        $region28: #{tpu_custom_call.1} parent=19 // pred_fallthru
          _
        // Predicated region
        $region29: #{tpu_custom_call.1} parent=19 // pred_check
          %p219 = pneg %p110
        $region30: #{tpu_custom_call.1} parent=19 // pred_check_branch
          %221 = sbr.rel (%p219) target = $region32
        $region31: #{tpu_custom_call.1} parent=19 // pred_region
          %p222 = scmp.lt.s32.totalorder %s17, 1
          %s223 = scalar_select %p222, %s17, 1
          %s224 = scalar_lea.vmem %s3, %s223
        $region32: #{tpu_custom_call.1} parent=19 // pred_fallthru
          _
      $region20: #{tpu_custom_call.1} parent=5 // pred_fallthru
        _
      %p225 = scmp.le.s32.totalorder 1, %s17
      %p226 = scmp.lt.s32.totalorder %s17, 3
      %p227 = pnand %p225, %p226
      %p228 = pneg %p227
      // Predicated region
      $region33: #{tpu_custom_call.1} parent=5 // pred_check
        _
      $region34: #{tpu_custom_call.1} parent=5 // pred_check_branch
        %230 = sbr.rel (%p227) target = $region36
      $region35: #{tpu_custom_call.1} parent=5 // pred_region
        %s231 = ssub.s32 %s17, 1
        %s232 = sand.u32 %s22, 1
        %s233 = scalar_lea.sflag [#allocation3], %s232
        %s234 = sand.u32 %s30, 1
        %s235 = smul.addr %s234, 16
        %s236 = scalar_lea.vmem [#allocation2], %s235
        // Predicated region
        $region37: #{tpu_custom_call.1} parent=35 // pred_check
          %p237 = pneg %p43
        $region38: #{tpu_custom_call.1} parent=35 // pred_check_branch
          %239 = sbr.rel (%p237) target = $region40
        $region39: #{tpu_custom_call.1} parent=35 // pred_region
          %241 = dma.done %s233, 256
        $region40: #{tpu_custom_call.1} parent=35 // pred_fallthru
          _
        // Predicated region
        $region41: #{tpu_custom_call.1} parent=35 // pred_check
          %p242 = pneg %p64
        $region42: #{tpu_custom_call.1} parent=35 // pred_check_branch
          %244 = sbr.rel (%p242) target = $region44
        $region43: #{tpu_custom_call.1} parent=35 // pred_region
          %246 = dma.done [#allocation6], 256
        $region44: #{tpu_custom_call.1} parent=35 // pred_fallthru
          _
        %s247 = sand.u32 %s22, 1
        %s248 = scalar_lea.sflag [#allocation3], %s247
        %s249 = sand.u32 %s77, 1
        %s250 = smul.addr %s249, 96
        %s251 = scalar_lea.vmem [#allocation7], %s250
        // Predicated region
        $region45: #{tpu_custom_call.1} parent=35 // pred_check
          %p252 = pneg %p90
        $region46: #{tpu_custom_call.1} parent=35 // pred_check_branch
          %254 = sbr.rel (%p252) target = $region48
        $region47: #{tpu_custom_call.1} parent=35 // pred_region
          %256 = dma.done %s248, 1536
        $region48: #{tpu_custom_call.1} parent=35 // pred_fallthru
          _
        %s257 = sand.u32 %s22, 1
        %s258 = scalar_lea.sflag [#allocation3], %s257
        %s259 = sand.u32 %s30, 1
        %s260 = smul.addr %s259, 16
        %s261 = scalar_lea.vmem [#allocation2], %s260
        %p262 = pneg %p43
        %p263 = pneg %p40
        %p264 = pneg %p64
        %p265 = pneg %p61
        %s266 = sand.u32 %s22, 1
        %s267 = scalar_lea.sflag [#allocation3], %s266
        %s268 = sand.u32 %s77, 1
        %s269 = smul.addr %s268, 96
        %s270 = scalar_lea.vmem [#allocation7], %s269
        %p271 = pneg %p90
        %p272 = pneg %p87
        %p273 = scmp.lt.s32.totalorder %s22, 1
        %s274 = scalar_select %p273, %s22, 1
        %s275 = scalar_lea.vmem %s3, %s274
        %p276 = pneg %p116
        %p277 = pneg %p113
        %p278 = pneg %p142
        %p279 = pneg %p139
        %s280 = sand.u32 %s129, 1
        %s281 = scalar_lea.sflag [#allocation4], %s280
        %s282 = sand.u32 %s129, 1
        %s283 = smul.addr %s282, 16
        %s284 = scalar_lea.vmem [#allocation8], %s283
        %p285 = scmp.lt.s32.totalorder %s22, 1
        %s286 = scalar_select %p285, %s22, 1
        %s287 = scalar_lea.vmem %s3, %s286
        %v288 = vld [vmem:[%s236] sm:$0xff]
        %v289 = vld [vmem:[%s236 + $0x8] sm:$0xff]
        %v290 = vld [vmem:[#allocation5] sm:$0xff]
        %v291 = vld [vmem:[#allocation5 + $0x8] sm:$0xff]
        %p292 = scmp.eq.s32.totalorder %s22, 0
        // Predicated region
        $region49: #{tpu_custom_call.1} parent=35 // pred_check
          %p293 = pneg %p292
        $region50: #{tpu_custom_call.1} parent=35 // pred_check_branch
          %295 = sbr.rel (%p293) target = $region52
        $region51: #{tpu_custom_call.1} parent=35 // pred_region
          %vm296 = vcmask 130048
          %v298 = vsel %vm296, %v288, 0
          %v301 = vsel %vm296, %v289, 0
          %303 = vmatpush.msra.mxu0 0.0
          %304 = vmatpush.msra.mxu0 0.0
          %305 = vmatpush.msra.mxu0 0.0
          %306 = vmatpush.msra.mxu0 0.0
          %307 = vmatpush.msra.mxu0 0.0
          %308 = vmatpush.msra.mxu0 0.0
          %309 = vmatpush.msra.mxu0 0.0
          %310 = vmatpush.msra.mxu0 0.0
          %311 = vmatpush.msra.mxu0 0.0
          %312 = vmatpush.msra.mxu0 0.0
          %313 = vmatpush.msra.mxu0 0.0
          %314 = vmatpush.msra.mxu0 0.0
          %315 = vmatpush.msra.mxu0 0.0
          %316 = vmatpush.msra.mxu0 0.0
          %317 = vmatpush.msra.mxu0 %v291
          %318 = vmatpush.msra.mxu0 %v290
          %319 = vmatmul.f32.gmra.mxu0 %v298
          %v320 = vpop.f32.mrf.mxu0
          %v321 = vadd.f32 0.0, %v320
          %322 = vmatmul.f32.gmra.mxu0 %v301
          %v323 = vpop.f32.mrf.mxu0
          %v324 = vadd.f32 0.0, %v323
          %325 = vdwg.mxu0
          %326 = vmatpush.msra.mxu0 0.0
          %327 = vmatpush.msra.mxu0 0.0
          %328 = vmatpush.msra.mxu0 0.0
          %329 = vmatpush.msra.mxu0 0.0
          %330 = vmatpush.msra.mxu0 0.0
          %331 = vmatpush.msra.mxu0 0.0
          %332 = vmatpush.msra.mxu0 0.0
          %333 = vmatpush.msra.mxu0 0.0
          %334 = vmatpush.msra.mxu0 0.0
          %335 = vmatpush.msra.mxu0 0.0
          %336 = vmatpush.msra.mxu0 0.0
          %337 = vmatpush.msra.mxu0 0.0
          %338 = vmatpush.msra.mxu0 0.0
          %339 = vmatpush.msra.mxu0 0.0
          %340 = vmatpush.msra.mxu0 %v324
          %341 = vmatpush.msra.mxu0 %v321
          %342 = vmatmul.f32.gmra.mxu0 %v298
          %v343 = vpop.f32.mrf.mxu0
          %v344 = vadd.f32 0.0, %v343
          %345 = vmatmul.f32.gmra.mxu0 %v301
          %v346 = vpop.f32.mrf.mxu0
          %v347 = vadd.f32 0.0, %v346
          %348 = vdwg.mxu0
          %349 = vmatpush.msra.mxu0 0.0
          %350 = vmatpush.msra.mxu0 0.0
          %351 = vmatpush.msra.mxu0 0.0
          %352 = vmatpush.msra.mxu0 0.0
          %353 = vmatpush.msra.mxu0 0.0
          %354 = vmatpush.msra.mxu0 0.0
          %355 = vmatpush.msra.mxu0 0.0
          %356 = vmatpush.msra.mxu0 0.0
          %357 = vmatpush.msra.mxu0 0.0
          %358 = vmatpush.msra.mxu0 0.0
          %359 = vmatpush.msra.mxu0 0.0
          %360 = vmatpush.msra.mxu0 0.0
          %361 = vmatpush.msra.mxu0 0.0
          %362 = vmatpush.msra.mxu0 0.0
          %363 = vmatpush.msra.mxu0 %v347
          %364 = vmatpush.msra.mxu0 %v344
          %365 = vmatmul.f32.gmra.mxu0 %v298
          %v366 = vpop.f32.mrf.mxu0
          %v367 = vadd.f32 0.0, %v366
          %368 = vmatmul.f32.gmra.mxu0 %v301
          %v369 = vpop.f32.mrf.mxu0
          %v370 = vadd.f32 0.0, %v369
          %371 = vdwg.mxu0
          %374 = vrot.lane.b32.xlu0 %v344, 32
          %v375 = vpop.permute.xlu0 %374
          %376 = vrot.lane.b32.xlu0 %v347, 32
          %v377 = vpop.permute.xlu0 %376
          %382 = vrot.lane.b32.xlu0 %v367, 64
          %v383 = vpop.permute.xlu0 %382
          %384 = vrot.lane.b32.xlu0 %v370, 64
          %v385 = vpop.permute.xlu0 %384
          %vm388 = vcmask 261120
          %v389 = vsel %vm388, %v321, %v375
          %v390 = vsel %vm388, %v324, %v377
          %vm391 = vcmask 523264
          %v392 = vsel %vm391, %v389, %v383
          %v393 = vsel %vm391, %v390, %v385
          %v394 = vld [vmem:[%s251] sm:$0xff]
          %v395 = vld [vmem:[%s251 + $0x8] sm:$0xff]
          %v396 = vld [vmem:[%s251 + $0x10] sm:$0xff]
          %v397 = vld [vmem:[%s251 + $0x18] sm:$0xff]
          %v398 = vld [vmem:[%s251 + $0x20] sm:$0xff]
          %v399 = vld [vmem:[%s251 + $0x28] sm:$0xff]
          %v400 = vld [vmem:[%s251 + $0x30] sm:$0xff]
          %v401 = vld [vmem:[%s251 + $0x38] sm:$0xff]
          %v402 = vld [vmem:[%s251 + $0x40] sm:$0xff]
          %v403 = vld [vmem:[%s251 + $0x48] sm:$0xff]
          %v404 = vld [vmem:[%s251 + $0x50] sm:$0xff]
          %v405 = vld [vmem:[%s251 + $0x58] sm:$0xff]
          %v406 = vld [vmem:[%s287] sm:$0x1]
          %v408 = vperm.slane %v406, 0
          %vm410 = vcmask 785408
          %v412 = vsel %vm410, %v392, 0
          %v415 = vsel %vm410, %v393, 0
          %417 = vmatpush.msra.mxu0 0.0
          %418 = vmatpush.msra.mxu0 0.0
          %419 = vmatpush.msra.mxu0 0.0
          %420 = vmatpush.msra.mxu0 0.0
          %421 = vmatpush.msra.mxu0 %v405
          %422 = vmatpush.msra.mxu0 %v404
          %423 = vmatpush.msra.mxu0 %v403
          %424 = vmatpush.msra.mxu0 %v402
          %425 = vmatpush.msra.mxu0 %v401
          %426 = vmatpush.msra.mxu0 %v400
          %427 = vmatpush.msra.mxu0 %v399
          %428 = vmatpush.msra.mxu0 %v398
          %429 = vmatpush.msra.mxu0 %v397
          %430 = vmatpush.msra.mxu0 %v396
          %431 = vmatpush.msra.mxu0 %v395
          %432 = vmatpush.msra.mxu0 %v394
          %433 = vmatmul.f32.gmra.mxu0 %v412
          %v434 = vpop.f32.mrf.mxu0
          %v435 = vadd.f32 %v408, %v434
          %436 = vmatmul.f32.gmra.mxu0 %v415
          %v437 = vpop.f32.mrf.mxu0
          %v438 = vadd.f32 %v408, %v437
          %439 = vdwg.mxu0
          %440 = vst [vmem:[%s284] sm:$0xff] %v435
          %441 = vst [vmem:[%s284 + $0x8] sm:$0xff] %v438
        $region52: #{tpu_custom_call.1} parent=35 // pred_fallthru
          _
        %p442 = scmp.eq.s32.totalorder %s22, 1
        // Predicated region
        $region53: #{tpu_custom_call.1} parent=35 // pred_check
          %p443 = pneg %p442
        $region54: #{tpu_custom_call.1} parent=35 // pred_check_branch
          %445 = sbr.rel (%p443) target = $region56
        $region55: #{tpu_custom_call.1} parent=35 // pred_region
          %446 = vxpose.xlu0.b32.start [1/16] %v288, 128
          %447 = vxpose.xlu0.b32.cont [2/16] %v289, 128
          %448 = vxpose.xlu0.b32.cont [3/16] 0.0, 128
          %449 = vxpose.xlu0.b32.cont [4/16] 0.0, 128
          %450 = vxpose.xlu0.b32.cont [5/16] 0.0, 128
          %451 = vxpose.xlu0.b32.cont [6/16] 0.0, 128
          %452 = vxpose.xlu0.b32.cont [7/16] 0.0, 128
          %453 = vxpose.xlu0.b32.cont [8/16] 0.0, 128
          %454 = vxpose.xlu0.b32.cont [9/16] 0.0, 128
          %455 = vxpose.xlu0.b32.cont [10/16] 0.0, 128
          %456 = vxpose.xlu0.b32.cont [11/16] 0.0, 128
          %457 = vxpose.xlu0.b32.cont [12/16] 0.0, 128
          %458 = vxpose.xlu0.b32.cont [13/16] 0.0, 128
          %459 = vxpose.xlu0.b32.cont [14/16] 0.0, 128
          %460 = vxpose.xlu0.b32.cont [15/16] 0.0, 128
          %461 = vxpose.xlu0.b32.end [16/16] 0.0, 128
          %v462 = vpop.trf.xlu0
          %v463 = vpop.trf.xlu0
          %v464 = vpop.trf.xlu0
          %v465 = vpop.trf.xlu0
          %v466 = vpop.trf.xlu0
          %v467 = vpop.trf.xlu0
          %v468 = vpop.trf.xlu0
          %v469 = vpop.trf.xlu0
          %v470 = vpop.trf.xlu0
          %v471 = vpop.trf.xlu0
          %v472 = vpop.trf.xlu0
          %v473 = vpop.trf.xlu0
          %v474 = vpop.trf.xlu0
          %v475 = vpop.trf.xlu0
          %v476 = vpop.trf.xlu0
          %v477 = vpop.trf.xlu0
          %vm478 = vcmask 130048
          %v480 = vsel %vm478, %v462, 0
          %v483 = vsel %vm478, %v463, 0
          %485 = vmatpush.msra.mxu0 0.0
          %486 = vmatpush.msra.mxu0 0.0
          %487 = vmatpush.msra.mxu0 0.0
          %488 = vmatpush.msra.mxu0 0.0
          %489 = vmatpush.msra.mxu0 0.0
          %490 = vmatpush.msra.mxu0 0.0
          %491 = vmatpush.msra.mxu0 0.0
          %492 = vmatpush.msra.mxu0 0.0
          %493 = vmatpush.msra.mxu0 0.0
          %494 = vmatpush.msra.mxu0 0.0
          %495 = vmatpush.msra.mxu0 0.0
          %496 = vmatpush.msra.mxu0 0.0
          %497 = vmatpush.msra.mxu0 0.0
          %498 = vmatpush.msra.mxu0 0.0
          %499 = vmatpush.msra.mxu0 1.0
          %500 = vmatpush.msra.mxu0 1.0
          %501 = vmatmul.f32.gmra.mxu0 %v480
          %v502 = vpop.f32.mrf.mxu0
          %v503 = vadd.f32 0.0, %v502
          %504 = vmatmul.f32.gmra.mxu0 %v483
          %v505 = vpop.f32.mrf.mxu0
          %v506 = vadd.f32 0.0, %v505
          %507 = vdwg.mxu0
          %v508 = vrcp.pop %v503
          %v509 = vmul.f32 %v503, %v508
          %v510 = vsub.f32 1.0, %v509
          %v511 = vmul.f32 %v508, %v510
          %v512 = vadd.f32 %v508, %v511
          %vm513 = vweird.f32 %v503
          %vm514 = vweird.f32 %v508
          %vm515 = vmor %vm513, %vm514
          %v516 = vsel %vm515, %v508, %v512
          %v517 = vand.u32 2147483647, %v503
          %vm518 = vcmp.eq.f32.partialorder %v517, 8.507059e+37
          %v519 = vand.u32 %v503, 2147483648
          %v520 = vor.u32 1.1754944e-38, %v519
          %v521 = vsel %vm518, %v520, %v516
          %v522 = vmul.f32 1.0, %v521
          %v523 = vrcp.pop %v506
          %v524 = vmul.f32 %v506, %v523
          %v525 = vsub.f32 1.0, %v524
          %v526 = vmul.f32 %v523, %v525
          %v527 = vadd.f32 %v523, %v526
          %vm528 = vweird.f32 %v506
          %vm529 = vweird.f32 %v523
          %vm530 = vmor %vm528, %vm529
          %v531 = vsel %vm530, %v523, %v527
          %v532 = vand.u32 2147483647, %v506
          %vm533 = vcmp.eq.f32.partialorder %v532, 8.507059e+37
          %v534 = vand.u32 %v506, 2147483648
          %v535 = vor.u32 1.1754944e-38, %v534
          %v536 = vsel %vm533, %v535, %v531
          %v537 = vmul.f32 1.0, %v536
          %539 = vset.pattern.permute.xlu0 0
          %540 = vperm.xlu0 %539, %v522
          %v541 = vpop.permute.xlu0 %540
          %544 = vset.pattern.permute.xlu0 0
          %545 = vperm.xlu0 %544, %v537
          %v546 = vpop.permute.xlu0 %545
          %v548 = vmul.f32 %v541, %v290
          %v549 = vmul.f32 %v546, %v291
          %v551 = vsel %vm478, %v288, 0
          %v554 = vsel %vm478, %v289, 0
          %556 = vmatpush.msra.mxu0 0.0
          %557 = vmatpush.msra.mxu0 0.0
          %558 = vmatpush.msra.mxu0 0.0
          %559 = vmatpush.msra.mxu0 0.0
          %560 = vmatpush.msra.mxu0 0.0
          %561 = vmatpush.msra.mxu0 0.0
          %562 = vmatpush.msra.mxu0 0.0
          %563 = vmatpush.msra.mxu0 0.0
          %564 = vmatpush.msra.mxu0 0.0
          %565 = vmatpush.msra.mxu0 0.0
          %566 = vmatpush.msra.mxu0 0.0
          %567 = vmatpush.msra.mxu0 0.0
          %568 = vmatpush.msra.mxu0 0.0
          %569 = vmatpush.msra.mxu0 0.0
          %570 = vmatpush.msra.mxu0 %v549
          %571 = vmatpush.msra.mxu0 %v548
          %572 = vmatmul.f32.gmra.mxu0 %v551
          %v573 = vpop.f32.mrf.mxu0
          %v574 = vadd.f32 %v290, %v573
          %575 = vmatmul.f32.gmra.mxu0 %v554
          %v576 = vpop.f32.mrf.mxu0
          %v577 = vadd.f32 %v291, %v576
          %578 = vdwg.mxu0
          %v579 = vmul.f32 %v574, 0.5
          %v580 = vmul.f32 %v577, 0.5
          %v581 = vmul.f32 %v541, %v579
          %v582 = vmul.f32 %v546, %v580
          %583 = vmatpush.msra.mxu0 0.0
          %584 = vmatpush.msra.mxu0 0.0
          %585 = vmatpush.msra.mxu0 0.0
          %586 = vmatpush.msra.mxu0 0.0
          %587 = vmatpush.msra.mxu0 0.0
          %588 = vmatpush.msra.mxu0 0.0
          %589 = vmatpush.msra.mxu0 0.0
          %590 = vmatpush.msra.mxu0 0.0
          %591 = vmatpush.msra.mxu0 0.0
          %592 = vmatpush.msra.mxu0 0.0
          %593 = vmatpush.msra.mxu0 0.0
          %594 = vmatpush.msra.mxu0 0.0
          %595 = vmatpush.msra.mxu0 0.0
          %596 = vmatpush.msra.mxu0 0.0
          %597 = vmatpush.msra.mxu0 %v582
          %598 = vmatpush.msra.mxu0 %v581
          %599 = vmatmul.f32.gmra.mxu0 %v551
          %v600 = vpop.f32.mrf.mxu0
          %v601 = vadd.f32 %v579, %v600
          %602 = vmatmul.f32.gmra.mxu0 %v554
          %v603 = vpop.f32.mrf.mxu0
          %v604 = vadd.f32 %v580, %v603
          %605 = vdwg.mxu0
          %v606 = vmul.f32 %v601, 0.5
          %v607 = vmul.f32 %v604, 0.5
          %v608 = vmul.f32 %v541, %v606
          %v609 = vmul.f32 %v546, %v607
          %610 = vmatpush.msra.mxu0 0.0
          %611 = vmatpush.msra.mxu0 0.0
          %612 = vmatpush.msra.mxu0 0.0
          %613 = vmatpush.msra.mxu0 0.0
          %614 = vmatpush.msra.mxu0 0.0
          %615 = vmatpush.msra.mxu0 0.0
          %616 = vmatpush.msra.mxu0 0.0
          %617 = vmatpush.msra.mxu0 0.0
          %618 = vmatpush.msra.mxu0 0.0
          %619 = vmatpush.msra.mxu0 0.0
          %620 = vmatpush.msra.mxu0 0.0
          %621 = vmatpush.msra.mxu0 0.0
          %622 = vmatpush.msra.mxu0 0.0
          %623 = vmatpush.msra.mxu0 0.0
          %624 = vmatpush.msra.mxu0 %v609
          %625 = vmatpush.msra.mxu0 %v608
          %626 = vmatmul.f32.gmra.mxu0 %v551
          %v627 = vpop.f32.mrf.mxu0
          %v628 = vadd.f32 %v606, %v627
          %629 = vmatmul.f32.gmra.mxu0 %v554
          %v630 = vpop.f32.mrf.mxu0
          %v631 = vadd.f32 %v607, %v630
          %632 = vdwg.mxu0
          %v633 = vmul.f32 %v628, 0.5
          %v634 = vmul.f32 %v631, 0.5
          %v635 = vmul.f32 %v541, %v633
          %v636 = vmul.f32 %v546, %v634
          %637 = vmatpush.msra.mxu0 0.0
          %638 = vmatpush.msra.mxu0 0.0
          %639 = vmatpush.msra.mxu0 0.0
          %640 = vmatpush.msra.mxu0 0.0
          %641 = vmatpush.msra.mxu0 0.0
          %642 = vmatpush.msra.mxu0 0.0
          %643 = vmatpush.msra.mxu0 0.0
          %644 = vmatpush.msra.mxu0 0.0
          %645 = vmatpush.msra.mxu0 0.0
          %646 = vmatpush.msra.mxu0 0.0
          %647 = vmatpush.msra.mxu0 0.0
          %648 = vmatpush.msra.mxu0 0.0
          %649 = vmatpush.msra.mxu0 0.0
          %650 = vmatpush.msra.mxu0 0.0
          %651 = vmatpush.msra.mxu0 %v636
          %652 = vmatpush.msra.mxu0 %v635
          %653 = vmatmul.f32.gmra.mxu0 %v551
          %v654 = vpop.f32.mrf.mxu0
          %v655 = vadd.f32 %v633, %v654
          %656 = vmatmul.f32.gmra.mxu0 %v554
          %v657 = vpop.f32.mrf.mxu0
          %v658 = vadd.f32 %v634, %v657
          %659 = vdwg.mxu0
          %v660 = vmul.f32 %v655, 0.5
          %v661 = vmul.f32 %v658, 0.5
          %v662 = vsub.f32 %v579, %v606
          %v663 = vsub.f32 %v580, %v607
          %v664 = vsub.f32 %v606, %v660
          %v665 = vsub.f32 %v607, %v661
          %668 = vrot.lane.b32.xlu0 %v664, 32
          %v669 = vpop.permute.xlu0 %668
          %670 = vrot.lane.b32.xlu0 %v665, 32
          %v671 = vpop.permute.xlu0 %670
          %vm674 = vcmask 261120
          %v675 = vsel %vm674, %v662, %v669
          %v676 = vsel %vm674, %v663, %v671
          %v677 = vld [vmem:[%s251] sm:$0xff]
          %v678 = vld [vmem:[%s251 + $0x8] sm:$0xff]
          %v679 = vld [vmem:[%s251 + $0x10] sm:$0xff]
          %v680 = vld [vmem:[%s251 + $0x18] sm:$0xff]
          %v681 = vld [vmem:[%s251 + $0x20] sm:$0xff]
          %v682 = vld [vmem:[%s251 + $0x28] sm:$0xff]
          %v683 = vld [vmem:[%s251 + $0x30] sm:$0xff]
          %v684 = vld [vmem:[%s251 + $0x38] sm:$0xff]
          %v685 = vld [vmem:[%s287] sm:$0x1]
          %v687 = vperm.slane %v685, 0
          %vm689 = vcmask 523264
          %v691 = vsel %vm689, %v675, 0
          %v694 = vsel %vm689, %v676, 0
          %696 = vmatpush.msra.mxu0 0.0
          %697 = vmatpush.msra.mxu0 0.0
          %698 = vmatpush.msra.mxu0 0.0
          %699 = vmatpush.msra.mxu0 0.0
          %700 = vmatpush.msra.mxu0 0.0
          %701 = vmatpush.msra.mxu0 0.0
          %702 = vmatpush.msra.mxu0 0.0
          %703 = vmatpush.msra.mxu0 0.0
          %704 = vmatpush.msra.mxu0 %v684
          %705 = vmatpush.msra.mxu0 %v683
          %706 = vmatpush.msra.mxu0 %v682
          %707 = vmatpush.msra.mxu0 %v681
          %708 = vmatpush.msra.mxu0 %v680
          %709 = vmatpush.msra.mxu0 %v679
          %710 = vmatpush.msra.mxu0 %v678
          %711 = vmatpush.msra.mxu0 %v677
          %712 = vmatmul.f32.gmra.mxu0 %v691
          %v713 = vpop.f32.mrf.mxu0
          %v714 = vadd.f32 %v687, %v713
          %715 = vmatmul.f32.gmra.mxu0 %v694
          %v716 = vpop.f32.mrf.mxu0
          %v717 = vadd.f32 %v687, %v716
          %718 = vdwg.mxu0
          %719 = vst [vmem:[%s284] sm:$0xff] %v714
          %720 = vst [vmem:[%s284 + $0x8] sm:$0xff] %v717
        $region56: #{tpu_custom_call.1} parent=35 // pred_fallthru
          _
        %s721 = sand.u32 %s129, 1
        %s722 = scalar_lea.sflag [#allocation4], %s721
        %s723 = sand.u32 %s129, 1
        %s724 = smul.addr %s723, 16
        %s725 = scalar_lea.vmem [#allocation8], %s724
        // Predicated region
        $region57: #{tpu_custom_call.1} parent=35 // pred_check
          %p726 = pneg %p139
        $region58: #{tpu_custom_call.1} parent=35 // pred_check_branch
          %728 = sbr.rel (%p726) target = $region60
        $region59: #{tpu_custom_call.1} parent=35 // pred_region
          %730 = vsyncadd %s722, 0
          %s731 = smul.addr %s22, 8
          %s732 = scalar_lea.hbm %s4, %s731
          %s733 = sshll.u32 %s725, 4
          %s734 = int_to_ptr.vmem [resolvable:$true] %s733
          %s735 = sshll.u32 %s732, 4
          %s736 = int_to_ptr.hbm [resolvable:$true] %s735
          %741 = dma.vmem_to_hbm [thread:$0]  %s734, 256, %s736, %s722, 128, 256, 8
        $region60: #{tpu_custom_call.1} parent=35 // pred_fallthru
          _
      $region36: #{tpu_custom_call.1} parent=5 // pred_fallthru
        _
      %p742 = scmp.le.s32.totalorder 2, %s17
      // Predicated region
      $region61: #{tpu_custom_call.1} parent=5 // pred_check
        %p743 = pneg %p742
      $region62: #{tpu_custom_call.1} parent=5 // pred_check_branch
        %745 = sbr.rel (%p743) target = $region64
      $region63: #{tpu_custom_call.1} parent=5 // pred_region
        %s746 = ssub.s32 %s17, 2
        // Predicated region
        $region65: #{tpu_custom_call.1} parent=63 // pred_check
          %p747 = pneg %p145
        $region66: #{tpu_custom_call.1} parent=63 // pred_check_branch
          %749 = sbr.rel (%p747) target = $region68
        $region67: #{tpu_custom_call.1} parent=63 // pred_region
          %s750 = sand.u32 %s130, 1
          %s751 = scalar_lea.sflag [#allocation4], %s750
          %s752 = sand.u32 %s130, 1
          %s753 = smul.addr %s752, 16
          %s754 = scalar_lea.vmem [#allocation8], %s753
          %756 = dma.done %s751, 256
        $region68: #{tpu_custom_call.1} parent=63 // pred_fallthru
          _
      $region64: #{tpu_custom_call.1} parent=5 // pred_fallthru
        _
    $region6: #{tpu_custom_call.1} parent=1 // loop_footer
      %s21 = sadd.s32 1, %s17
    $region7: #{tpu_custom_call.1} parent=1 // loop_footer_branch
      %16 = sbr.rel target = $region3
    $region8: #{tpu_custom_call.1} parent=1 // loop_exit
      _
    %757 = vsyncpa [#allocation3], 1
    %s758 = scalar_lea.sflag [#allocation3], 1
    %759 = vsyncpa %s758, 1
    %760 = vsyncpa [#allocation6], 1
    %761 = vsyncpa [#allocation4], 1
    %s762 = scalar_lea.sflag [#allocation4], 1
    %763 = vsyncpa %s762, 1

</llo_original>
